<compile_context>
chip_gen: v6e
topology: v6e:2x2x1
jax: 0.10.0
libtpu: 0.0.40
codegen_flags: <defaults>
</compile_context>

<pallas_src>
import functools

import jax
import jax.numpy as jnp
import numpy as np
from jax.experimental import pallas as pl
from jax.experimental.pallas import tpu as pltpu

# ------------------------- loss hyper-parameters (module defaults) ----------
EPS = 1e-7          # SiLogLoss.eps
LAMBDA_VAR = 0.85   # SiLogLoss.lambda_var
ALPHA = 1.0         # EdgeAwareSmoothnessLoss.alpha
BETA = 1.0          # EdgeAwareSmoothnessLoss.beta
GRAD_WX = 1.0       # GradientConsistencyLoss.weight_x
GRAD_WY = 1.0       # GradientConsistencyLoss.weight_y
W_SILOG = 1.0       # MultiLoss.silog_weight
W_SMOOTH = 0.1      # MultiLoss.smoothness_weight
W_GRAD = 0.1        # MultiLoss.gradient_weight
# berhu_weight = 0.0 -> BerHuLoss branch never executes (matches PyTorch).

# rows of the per-batch partial-sum block (row 7 unused / zero)
_R_S1, _R_S2, _R_CNT, _R_SMX, _R_SMY, _R_GX, _R_GY = range(7)


# ------------------------- tiling / sizing helpers ---------------------------
def _sublane_multiple(dtype):
    # min second-minor block multiple: f32 -> 8, bf16 -> 16, int8/fp8 -> 32
    return max(8, 32 // jnp.dtype(dtype).itemsize)


def _vmem_limit_bytes():
    cap = 64 << 20
    try:
        info = pltpu.get_tpu_info()
        cap = int(getattr(info, "vmem_capacity_bytes", cap))
    except Exception:
        pass
    # 3/4 of physical, capped at 64 MiB: 48 MiB on v7x (64 MiB VMEM),
    # 64 MiB on v5e/v6e (128 MiB VMEM).
    return int(min(max(cap * 3 // 4, 32 << 20), 64 << 20))


def _choose_h_tiling(H, row_bytes, min_sub, *, budget_bytes, max_rows=512,
                     tile_h=None):
    """Return (tile_h, H_pad). tile_h is a multiple of min_sub (or == H); H_pad
    is the padded height (multiple of tile_h)."""
    if tile_h is not None:
        th = int(tile_h)
        if th <= 0:
            raise ValueError("tile_h must be positive")
        if th != H and th % min_sub != 0:
            raise ValueError(f"tile_h={th} must be a multiple of {min_sub} or equal H")
        return th, -(-H // th) * th
    if H <= min_sub:
        return H, H                       # single full-extent tile
    cap = min(H, max_rows, max(min_sub, budget_bytes // max(row_bytes, 1)))
    cap = max(min_sub, (cap // min_sub) * min_sub)
    # prefer an exact divisor of H (no padding) that is not much smaller than cap
    floor_th = max(min_sub, (cap // 4 // min_sub) * min_sub)
    th = cap
    while th >= floor_th:
        if H % th == 0:
            return th, H
        th -= min_sub
    # otherwise pad H up to a multiple of the largest tile that fits the budget
    return cap, -(-H // cap) * cap


def _isfin(x):
    # abs(x) < inf is False for both +-inf and NaN -> same mask as isfinite,
    # lowered with plain compares (always supported).
    return jnp.abs(x) < jnp.inf


# ------------------------------- kernel --------------------------------------
def multiloss_kernel(pred_ref, target_ref, image_ref, out_ref, carry_ref,
                     *, alpha_over_c, w_valid):
    t = pl.program_id(1)

    pred = pred_ref[...].astype(jnp.float32)       # (TH, W)
    target = target_ref[...].astype(jnp.float32)   # (TH, W)
    img_r = image_ref[0].astype(jnp.float32)       # (TH, W)
    img_g = image_ref[1].astype(jnp.float32)
    img_b = image_ref[2].astype(jnp.float32)
    TH, W = pred.shape

    def pack_rows(rows):
        # Pack a list of (1, W) rows into an (8, W) block (register-level
        # select; keeps the VMEM access a single dense load/store).
        ridx = jax.lax.broadcasted_iota(jnp.int32, (8, 1), 0)
        out = jnp.zeros((8, W), jnp.float32)
        for k, r in enumerate(rows):
            out = jnp.where(ridx == k, r, out)
        return out

    # ---- start of a batch: zero partial sums, seed the boundary-row carry ----
    @pl.when(t == 0)
    def _init():
        out_ref[...] = jnp.zeros_like(out_ref)
        carry_ref[...] = pack_rows(
            [pred[0:1, :], target[0:1, :], img_r[0:1, :], img_g[0:1, :], img_b[0:1, :]])

    # ---- SiLog partials (mask=None path): sublane-only reductions ------------
    valid = (target > EPS) & _isfin(target) & _isfin(pred)
    log_diff = jnp.where(valid, jnp.log(pred + EPS) - jnp.log(target + EPS), 0.0)
    s1_row = jnp.sum(log_diff, axis=0, keepdims=True)                  # (1, W)
    s2_row = jnp.sum(log_diff * log_diff, axis=0, keepdims=True)
    cnt_row = jnp.sum(valid.astype(jnp.float32), axis=0, keepdims=True)

    # ---- W-axis (lane) differences: unmasked roll, mask the reduced rows only
    def dx(x):  # x[:, j] - x[:, j+1]; lane W-1 wraps (finite, masked after reduce)
        return x - pltpu.roll(x, shift=W - 1, axis=1)

    pred_dx = dx(pred)
    tgt_dx = dx(target)
    img_adx = jnp.abs(dx(img_r)) + jnp.abs(dx(img_g)) + jnp.abs(dx(img_b))
    weight_x = jnp.exp(-alpha_over_c * img_adx)
    smx_row = jnp.sum(weight_x * jnp.abs(pred_dx), axis=0, keepdims=True)
    gx_row = jnp.sum(jnp.abs(pred_dx - tgt_dx), axis=0, keepdims=True)
    lane = jax.lax.broadcasted_iota(jnp.int32, (1, W), 1)
    lane_ok = lane < (w_valid - 1)          # drops wrap lane + padded lanes
    smx_row = jnp.where(lane_ok, smx_row, 0.0)
    gx_row = jnp.where(lane_ok, gx_row, 0.0)

    # ---- H-axis (sublane) differences: interior rows of this tile ------------
    pred_dy = pred[:-1, :] - pred[1:, :]
    tgt_dy = target[:-1, :] - target[1:, :]
    img_ady = (jnp.abs(img_r[:-1, :] - img_r[1:, :])
               + jnp.abs(img_g[:-1, :] - img_g[1:, :])
               + jnp.abs(img_b[:-1, :] - img_b[1:, :]))
    weight_y = jnp.exp(-alpha_over_c * img_ady)
    smy_row = jnp.sum(weight_y * jnp.abs(pred_dy), axis=0, keepdims=True)
    gy_row = jnp.sum(jnp.abs(pred_dy - tgt_dy), axis=0, keepdims=True)

    # ---- boundary row between the previous tile and this one -----------------
    # Single dense carry load; at t == 0 the carry equals this tile's own first
    # row, so both boundary terms are exactly 0.
    carry = carry_ref[...]                                          # (8, W)
    pd_b = carry[0:1, :] - pred[0:1, :]
    td_b = carry[1:2, :] - target[0:1, :]
    aim_b = (jnp.abs(carry[2:3, :] - img_r[0:1, :])
             + jnp.abs(carry[3:4, :] - img_g[0:1, :])
             + jnp.abs(carry[4:5, :] - img_b[0:1, :]))
    smy_row = smy_row + jnp.exp(-alpha_over_c * aim_b) * jnp.abs(pd_b)
    gy_row = gy_row + jnp.abs(pd_b - td_b)

    # ---- ONE dense (8, W) accumulate into the per-batch output block ---------
    out_ref[...] += pack_rows(
        [s1_row, s2_row, cnt_row, smx_row, smy_row, gx_row, gy_row])

    # ---- ONE dense carry writeback of this tile's last rows ------------------
    carry_ref[...] = pack_rows(
        [pred[TH - 1:TH, :], target[TH - 1:TH, :],
         img_r[TH - 1:TH, :], img_g[TH - 1:TH, :], img_b[TH - 1:TH, :]])


# ------------------------------- wrapper --------------------------------------
def multi_loss(pred, target, image, *, tile_h=None):
    """pred, target: (B, 1, H, W); image: (B, 3, H, W). Returns scalar f32."""
    B, C, H, W = pred.shape
    if C != 1 or target.shape != pred.shape or image.shape != (B, 3, H, W):
        raise ValueError("expected pred/target (B,1,H,W) and image (B,3,H,W)")
    if H < 2 or W < 2:
        raise ValueError("H and W must be >= 2 for gradient-based loss terms")

    pred2 = pred.reshape(B, H, W)        # keep native dtype (cast to f32 in-kernel)
    target2 = target.reshape(B, H, W)

    min_sub = max(_sublane_multiple(pred2.dtype),
                  _sublane_multiple(target2.dtype),
                  _sublane_multiple(image.dtype))
    W_pad = -(-W // 128) * 128           # lane-dense width (always multiple of 128)

    row_bytes = W_pad * (jnp.dtype(pred2.dtype).itemsize
                         + jnp.dtype(target2.dtype).itemsize
                         + 3 * jnp.dtype(image.dtype).itemsize)
    vmem_limit = _vmem_limit_bytes()
    budget = max(2 << 20, vmem_limit // 5)   # inputs x2 (double-buffer) + f32 temps
    tile_h, H_pad = _choose_h_tiling(H, row_bytes, min_sub,
                                     budget_bytes=budget, tile_h=tile_h)
    nt = H_pad // tile_h

    image_p = image
    if H_pad != H or W_pad != W:
        pred2 = jnp.pad(pred2, ((0, 0), (0, H_pad - H), (0, W_pad - W)))
        target2 = jnp.pad(target2, ((0, 0), (0, H_pad - H), (0, W_pad - W)))
        image_p = jnp.pad(image, ((0, 0), (0, 0), (0, H_pad - H), (0, W_pad - W)))

    kernel = functools.partial(
        multiloss_kernel,
        alpha_over_c=ALPHA / 3.0,            # fold channel mean into ALPHA
        w_valid=W,
    )

    in_bytes = (pred2.size * pred2.dtype.itemsize
                + target2.size * target2.dtype.itemsize
                + image_p.size * image_p.dtype.itemsize)
    out_bytes = B * 8 * W_pad * 4

    partials = pl.pallas_call(
        kernel,
        out_shape=jax.ShapeDtypeStruct((B, 8, W_pad), jnp.float32),
        grid_spec=pltpu.PrefetchScalarGridSpec(
            num_scalar_prefetch=0,
            grid=(B, nt),
            in_specs=[
                pl.BlockSpec((None, tile_h, W_pad), lambda b, t: (b, t, 0)),
                pl.BlockSpec((None, tile_h, W_pad), lambda b, t: (b, t, 0)),
                pl.BlockSpec((None, 3, tile_h, W_pad), lambda b, t: (b, 0, t, 0)),
            ],
            out_specs=pl.BlockSpec((None, 8, W_pad), lambda b, t: (b, 0, 0)),
            scratch_shapes=[pltpu.VMEM((8, W_pad), jnp.float32)],   # boundary carry
        ),
        compiler_params=pltpu.CompilerParams(
            # TODO(synk): on v7x with B == 1, add a second 'parallel' axis
            # (split H into two independent bands + seam fix) so both TCs stream HBM.
            dimension_semantics=("parallel", "arbitrary"),
            vmem_limit_bytes=vmem_limit,
        ),
        cost_estimate=pl.CostEstimate(
            flops=int(40 * B * H_pad * W_pad),
            transcendentals=int(4 * B * H_pad * W_pad),
            bytes_accessed=int(in_bytes + out_bytes),
        ),
    )(pred2, target2, image_p)

    # ---- cheap nonlinear finalize in plain JAX on (B, 8, W_pad) partials -----
    sums = jnp.sum(partials, axis=(0, 2))                       # (8,)
    s1, s2, cnt = sums[_R_S1], sums[_R_S2], sums[_R_CNT]
    smx, smy, gx, gy = sums[_R_SMX], sums[_R_SMY], sums[_R_GX], sums[_R_GY]

    if H_pad != H:
        # Zero-padded rows contribute nothing except a single spurious dy pair
        # (last real row <-> first pad row). Remove its exact contribution.
        p_last = pred.reshape(B, H, W)[:, -1, :].astype(jnp.float32)
        t_last = target.reshape(B, H, W)[:, -1, :].astype(jnp.float32)
        i_last = image[:, :, -1, :].astype(jnp.float32)
        w_seam = jnp.exp(-(ALPHA / 3.0) * jnp.sum(jnp.abs(i_last), axis=1))
        smy = smy - jnp.sum(w_seam * jnp.abs(p_last))
        gy = gy - jnp.sum(jnp.abs(p_last - t_last))

    safe_cnt = jnp.maximum(cnt, 1.0)
    mean_log = s1 / safe_cnt
    mse_log = s2 / safe_cnt
    silog = jnp.where(cnt > 0.0, mse_log - LAMBDA_VAR * mean_log * mean_log, 0.0)

    inv_dx = 1.0 / float(B * H * (W - 1))
    inv_dy = 1.0 / float(B * (H - 1) * W)
    smooth = BETA * (smx * inv_dx + smy * inv_dy)
    grad = GRAD_WX * gx * inv_dx + GRAD_WY * gy * inv_dy

    return W_SILOG * silog + W_SMOOTH * smooth + W_GRAD * grad


# ------------------------- pure-JAX reference (for validation) --------------
def multi_loss_ref(pred, target, image):
    p = pred[:, 0].astype(jnp.float32)
    t = target[:, 0].astype(jnp.float32)
    img = image.astype(jnp.float32)

    valid = (t > EPS) & jnp.isfinite(t) & jnp.isfinite(p)
    ld = jnp.where(valid, jnp.log(p + EPS) - jnp.log(t + EPS), 0.0)
    cnt = jnp.sum(valid.astype(jnp.float32))
    mse = jnp.sum(ld * ld) / cnt
    ml = jnp.sum(ld) / cnt
    silog = mse - LAMBDA_VAR * ml * ml

    p_dx = p[:, :, :-1] - p[:, :, 1:]
    p_dy = p[:, :-1, :] - p[:, 1:, :]
    i_dx = img[:, :, :, :-1] - img[:, :, :, 1:]
    i_dy = img[:, :, :-1, :] - img[:, :, 1:, :]
    wx = jnp.exp(-ALPHA * jnp.mean(jnp.abs(i_dx), axis=1))
    wy = jnp.exp(-ALPHA * jnp.mean(jnp.abs(i_dy), axis=1))
    smooth = BETA * (jnp.mean(wx * jnp.abs(p_dx)) + jnp.mean(wy * jnp.abs(p_dy)))

    t_dx = t[:, :, :-1] - t[:, :, 1:]
    t_dy = t[:, :-1, :] - t[:, 1:, :]
    grad = (GRAD_WX * jnp.mean(jnp.abs(p_dx - t_dx))
            + GRAD_WY * jnp.mean(jnp.abs(p_dy - t_dy)))

    return W_SILOG * silog + W_SMOOTH * smooth + W_GRAD * grad


if __name__ == "__main__":
    key = jax.random.PRNGKey(0)

    def make_inputs(k, B, H, W):
        k1, k2, k3 = jax.random.split(k, 3)
        pred = jax.random.uniform(k1, (B, 1, H, W), jnp.float32, minval=0.1, maxval=10.0)
        target = jax.random.uniform(k2, (B, 1, H, W), jnp.float32, minval=0.1, maxval=10.0)
        image = jax.random.uniform(k3, (B, 3, H, W), jnp.float32, minval=0.0, maxval=1.0)
        return pred, target, image

    cases = [
        dict(B=2, H=16, W=16, tile_h=None),    # W padded to 128, single H-tile
        dict(B=2, H=16, W=128, tile_h=None),   # no padding, single H-tile
        dict(B=2, H=32, W=128, tile_h=8),      # 4 H-tiles (boundary carry)
        dict(B=1, H=20, W=100, tile_h=None),   # H + W padding, dy seam correction
    ]
    for i, c in enumerate(cases):
        k = jax.random.fold_in(key, i)
        pred, target, image = make_inputs(k, c["B"], c["H"], c["W"])
        loss = jax.block_until_ready(multi_loss(pred, target, image, tile_h=c["tile_h"]))
        ref = jax.block_until_ready(multi_loss_ref(pred, target, image))
        np.testing.assert_allclose(np.asarray(loss), np.asarray(ref), rtol=2e-3, atol=2e-5)

    print("KERNEL_OK")
</pallas_src>

<mosaic_0001>
module attributes {stable_mosaic.version = 11 : i64} {
  func.func @multiloss_kernel(%arg0: i32, %arg1: i32, %arg2: memref<1x16x128xf32, #tpu.memory_space<vmem>>, %arg3: memref<1x16x128xf32, #tpu.memory_space<vmem>>, %arg4: memref<1x3x16x128xf32, #tpu.memory_space<vmem>>, %arg5: memref<1x8x128xf32, #tpu.memory_space<vmem>>, %arg6: memref<8x128xf32, #tpu.memory_space<vmem>>) attributes {dimension_semantics = [#tpu.dimension_semantics<parallel>, #tpu.dimension_semantics<arbitrary>], iteration_bounds = array<i64: 2, 1>, scalar_prefetch = 0 : i64, scratch_operands = 1 : i64, tpu.core_type = #tpu.core_type<tc>, window_params = [{transform_indices = @transform_0, window_bounds = array<i64: 1, 16, 128>}, {transform_indices = @transform_1, window_bounds = array<i64: 1, 16, 128>}, {transform_indices = @transform_2, window_bounds = array<i64: 1, 3, 16, 128>}, {transform_indices = @transform_3, window_bounds = array<i64: 1, 8, 128>}]} {
    %c0 = arith.constant 0 : index
    %c0_0 = arith.constant 0 : index
    %c0_1 = arith.constant 0 : index
    %0 = vector.load %arg2[%c0, %c0_0, %c0_1] : memref<1x16x128xf32, #tpu.memory_space<vmem>>, vector<1x16x128xf32>
    %1 = vector.shape_cast %0 : vector<1x16x128xf32> to vector<16x128xf32>
    %c0_2 = arith.constant 0 : index
    %c0_3 = arith.constant 0 : index
    %c0_4 = arith.constant 0 : index
    %2 = vector.load %arg3[%c0_2, %c0_3, %c0_4] : memref<1x16x128xf32, #tpu.memory_space<vmem>>, vector<1x16x128xf32>
    %3 = vector.shape_cast %2 : vector<1x16x128xf32> to vector<16x128xf32>
    %c0_5 = arith.constant 0 : index
    %c0_6 = arith.constant 0 : index
    %c0_7 = arith.constant 0 : index
    %c0_8 = arith.constant 0 : index
    %4 = vector.load %arg4[%c0_5, %c0_6, %c0_7, %c0_8] : memref<1x3x16x128xf32, #tpu.memory_space<vmem>>, vector<1x1x16x128xf32>
    %5 = vector.shape_cast %4 : vector<1x1x16x128xf32> to vector<16x128xf32>
    %c0_9 = arith.constant 0 : index
    %c1 = arith.constant 1 : index
    %c0_10 = arith.constant 0 : index
    %c0_11 = arith.constant 0 : index
    %6 = vector.load %arg4[%c0_9, %c1, %c0_10, %c0_11] : memref<1x3x16x128xf32, #tpu.memory_space<vmem>>, vector<1x1x16x128xf32>
    %7 = vector.shape_cast %6 : vector<1x1x16x128xf32> to vector<16x128xf32>
    %c0_12 = arith.constant 0 : index
    %c2 = arith.constant 2 : index
    %c0_13 = arith.constant 0 : index
    %c0_14 = arith.constant 0 : index
    %8 = vector.load %arg4[%c0_12, %c2, %c0_13, %c0_14] : memref<1x3x16x128xf32, #tpu.memory_space<vmem>>, vector<1x1x16x128xf32>
    %9 = vector.shape_cast %8 : vector<1x1x16x128xf32> to vector<16x128xf32>
    %c0_i32 = arith.constant 0 : i32
    %10 = arith.cmpi eq, %arg1, %c0_i32 : i32
    %11 = arith.extui %10 : i1 to i32
    %c0_i32_15 = arith.constant 0 : i32
    %12 = arith.cmpi ne, %11, %c0_i32_15 : i32
    scf.if %12 {
      %cst_55 = arith.constant 0.000000e+00 : f32
      %235 = vector.broadcast %cst_55 : f32 to vector<8x128xf32>
      %c0_56 = arith.constant 0 : index
      %c0_57 = arith.constant 0 : index
      %c0_58 = arith.constant 0 : index
      %236 = vector.load %arg5[%c0_56, %c0_57, %c0_58] : memref<1x8x128xf32, #tpu.memory_space<vmem>>, vector<1x8x128xf32>
      %237 = vector.shape_cast %236 : vector<1x8x128xf32> to vector<8x128xf32>
      %238 = vector.shape_cast %235 : vector<8x128xf32> to vector<1x8x128xf32>
      tpu.vector_store %arg5[%c0_56, %c0_57, %c0_58], %238 {strides = array<i32>} : memref<1x8x128xf32, #tpu.memory_space<vmem>>, vector<1x8x128xf32>,
      %239 = vector.extract_strided_slice %1 {offsets = [0, 0], sizes = [1, 128], strides = [1, 1]} : vector<16x128xf32> to vector<1x128xf32>
      %240 = vector.extract_strided_slice %3 {offsets = [0, 0], sizes = [1, 128], strides = [1, 1]} : vector<16x128xf32> to vector<1x128xf32>
      %241 = vector.extract_strided_slice %5 {offsets = [0, 0], sizes = [1, 128], strides = [1, 1]} : vector<16x128xf32> to vector<1x128xf32>
      %242 = vector.extract_strided_slice %7 {offsets = [0, 0], sizes = [1, 128], strides = [1, 1]} : vector<16x128xf32> to vector<1x128xf32>
      %243 = vector.extract_strided_slice %9 {offsets = [0, 0], sizes = [1, 128], strides = [1, 1]} : vector<16x128xf32> to vector<1x128xf32>
      %244 = tpu.iota {dimensions = array<i32: 0>} : vector<8x1xi32>
      %cst_59 = arith.constant 0.000000e+00 : f32
      %245 = vector.broadcast %cst_59 : f32 to vector<8x128xf32>
      %c0_i32_60 = arith.constant 0 : i32
      %246 = vector.broadcast %c0_i32_60 : i32 to vector<8x1xi32>
      %247 = arith.cmpi eq, %244, %246 : vector<8x1xi32>
      %248 = vector.shape_cast %247 : vector<8x1xi1> to vector<8x1xi1>
      %249 = vector.broadcast %248 : vector<8x1xi1> to vector<8x128xi1>
      %250 = vector.shape_cast %239 : vector<1x128xf32> to vector<1x128xf32>
      %251 = vector.broadcast %250 : vector<1x128xf32> to vector<8x128xf32>
      %252 = arith.select %249, %251, %245 : vector<8x128xi1>, vector<8x128xf32>
      %c1_i32_61 = arith.constant 1 : i32
      %253 = vector.broadcast %c1_i32_61 : i32 to vector<8x1xi32>
      %254 = arith.cmpi eq, %244, %253 : vector<8x1xi32>
      %255 = vector.shape_cast %254 : vector<8x1xi1> to vector<8x1xi1>
      %256 = vector.broadcast %255 : vector<8x1xi1> to vector<8x128xi1>
      %257 = vector.shape_cast %240 : vector<1x128xf32> to vector<1x128xf32>
      %258 = vector.broadcast %257 : vector<1x128xf32> to vector<8x128xf32>
      %259 = arith.select %256, %258, %252 : vector<8x128xi1>, vector<8x128xf32>
      %c2_i32_62 = arith.constant 2 : i32
      %260 = vector.broadcast %c2_i32_62 : i32 to vector<8x1xi32>
      %261 = arith.cmpi eq, %244, %260 : vector<8x1xi32>
      %262 = vector.shape_cast %261 : vector<8x1xi1> to vector<8x1xi1>
      %263 = vector.broadcast %262 : vector<8x1xi1> to vector<8x128xi1>
      %264 = vector.shape_cast %241 : vector<1x128xf32> to vector<1x128xf32>
      %265 = vector.broadcast %264 : vector<1x128xf32> to vector<8x128xf32>
      %266 = arith.select %263, %265, %259 : vector<8x128xi1>, vector<8x128xf32>
      %c3_i32_63 = arith.constant 3 : i32
      %267 = vector.broadcast %c3_i32_63 : i32 to vector<8x1xi32>
      %268 = arith.cmpi eq, %244, %267 : vector<8x1xi32>
      %269 = vector.shape_cast %268 : vector<8x1xi1> to vector<8x1xi1>
      %270 = vector.broadcast %269 : vector<8x1xi1> to vector<8x128xi1>
      %271 = vector.shape_cast %242 : vector<1x128xf32> to vector<1x128xf32>
      %272 = vector.broadcast %271 : vector<1x128xf32> to vector<8x128xf32>
      %273 = arith.select %270, %272, %266 : vector<8x128xi1>, vector<8x128xf32>
      %c4_i32_64 = arith.constant 4 : i32
      %274 = vector.broadcast %c4_i32_64 : i32 to vector<8x1xi32>
      %275 = arith.cmpi eq, %244, %274 : vector<8x1xi32>
      %276 = vector.shape_cast %275 : vector<8x1xi1> to vector<8x1xi1>
      %277 = vector.broadcast %276 : vector<8x1xi1> to vector<8x128xi1>
      %278 = vector.shape_cast %243 : vector<1x128xf32> to vector<1x128xf32>
      %279 = vector.broadcast %278 : vector<1x128xf32> to vector<8x128xf32>
      %280 = arith.select %277, %279, %273 : vector<8x128xi1>, vector<8x128xf32>
      %c0_65 = arith.constant 0 : index
      %c0_66 = arith.constant 0 : index
      %281 = vector.load %arg6[%c0_65, %c0_66] : memref<8x128xf32, #tpu.memory_space<vmem>>, vector<8x128xf32>
      tpu.vector_store %arg6[%c0_65, %c0_66], %280 {strides = array<i32>} : memref<8x128xf32, #tpu.memory_space<vmem>>, vector<8x128xf32>,
    } else {
    }
    %cst = arith.constant 1.000000e-07 : f32
    %13 = vector.broadcast %cst : f32 to vector<16x128xf32>
    %14 = arith.cmpf ogt, %3, %13 : vector<16x128xf32>
    %15 = math.absf %3 : vector<16x128xf32>
    %cst_16 = arith.constant 0x7F800000 : f32
    %16 = vector.broadcast %cst_16 : f32 to vector<16x128xf32>
    %17 = arith.cmpf olt, %15, %16 : vector<16x128xf32>
    %18 = arith.andi %14, %17 : vector<16x128xi1>
    %19 = math.absf %1 : vector<16x128xf32>
    %cst_17 = arith.constant 0x7F800000 : f32
    %20 = vector.broadcast %cst_17 : f32 to vector<16x128xf32>
    %21 = arith.cmpf olt, %19, %20 : vector<16x128xf32>
    %22 = arith.andi %18, %21 : vector<16x128xi1>
    %cst_18 = arith.constant 1.000000e-07 : f32
    %23 = vector.broadcast %cst_18 : f32 to vector<16x128xf32>
    %24 = arith.addf %1, %23 : vector<16x128xf32>
    %25 = math.log %24 : vector<16x128xf32>
    %cst_19 = arith.constant 1.000000e-07 : f32
    %26 = vector.broadcast %cst_19 : f32 to vector<16x128xf32>
    %27 = arith.addf %3, %26 : vector<16x128xf32>
    %28 = math.log %27 : vector<16x128xf32>
    %29 = arith.subf %25, %28 : vector<16x128xf32>
    %cst_20 = arith.constant 0.000000e+00 : f32
    %30 = vector.broadcast %cst_20 : f32 to vector<16x128xf32>
    %31 = arith.select %22, %29, %30 : vector<16x128xi1>, vector<16x128xf32>
    %cst_21 = arith.constant dense<0.000000e+00> : vector<128xf32>
    %32 = vector.multi_reduction <add>, %31, %cst_21 [0] : vector<16x128xf32> to vector<128xf32>
    %33 = vector.shape_cast %32 : vector<128xf32> to vector<1x128xf32>
    %34 = arith.mulf %31, %31 : vector<16x128xf32>
    %cst_22 = arith.constant dense<0.000000e+00> : vector<128xf32>
    %35 = vector.multi_reduction <add>, %34, %cst_22 [0] : vector<16x128xf32> to vector<128xf32>
    %36 = vector.shape_cast %35 : vector<128xf32> to vector<1x128xf32>
    %37 = arith.extui %22 : vector<16x128xi1> to vector<16x128xi32>
    %38 = arith.sitofp %37 : vector<16x128xi32> to vector<16x128xf32>
    %cst_23 = arith.constant dense<0.000000e+00> : vector<128xf32>
    %39 = vector.multi_reduction <add>, %38, %cst_23 [0] : vector<16x128xf32> to vector<128xf32>
    %40 = vector.shape_cast %39 : vector<128xf32> to vector<1x128xf32>
    %c127_i32 = arith.constant 127 : i32
    %41 = tpu.dynamic_rotate %1 by %c127_i32 dim 1 : vector<16x128xf32>, i32 -> vector<16x128xf32>
    %42 = arith.subf %1, %41 : vector<16x128xf32>
    %c127_i32_24 = arith.constant 127 : i32
    %43 = tpu.dynamic_rotate %3 by %c127_i32_24 dim 1 : vector<16x128xf32>, i32 -> vector<16x128xf32>
    %44 = arith.subf %3, %43 : vector<16x128xf32>
    %c127_i32_25 = arith.constant 127 : i32
    %45 = tpu.dynamic_rotate %5 by %c127_i32_25 dim 1 : vector<16x128xf32>, i32 -> vector<16x128xf32>
    %46 = arith.subf %5, %45 : vector<16x128xf32>
    %47 = math.absf %46 : vector<16x128xf32>
    %c127_i32_26 = arith.constant 127 : i32
    %48 = tpu.dynamic_rotate %7 by %c127_i32_26 dim 1 : vector<16x128xf32>, i32 -> vector<16x128xf32>
    %49 = arith.subf %7, %48 : vector<16x128xf32>
    %50 = math.absf %49 : vector<16x128xf32>
    %51 = arith.addf %47, %50 : vector<16x128xf32>
    %c127_i32_27 = arith.constant 127 : i32
    %52 = tpu.dynamic_rotate %9 by %c127_i32_27 dim 1 : vector<16x128xf32>, i32 -> vector<16x128xf32>
    %53 = arith.subf %9, %52 : vector<16x128xf32>
    %54 = math.absf %53 : vector<16x128xf32>
    %55 = arith.addf %51, %54 : vector<16x128xf32>
    %cst_28 = arith.constant -0.333333343 : f32
    %56 = vector.broadcast %cst_28 : f32 to vector<16x128xf32>
    %57 = arith.mulf %56, %55 : vector<16x128xf32>
    %58 = math.exp %57 : vector<16x128xf32>
    %59 = math.absf %42 : vector<16x128xf32>
    %60 = arith.mulf %58, %59 : vector<16x128xf32>
    %cst_29 = arith.constant dense<0.000000e+00> : vector<128xf32>
    %61 = vector.multi_reduction <add>, %60, %cst_29 [0] : vector<16x128xf32> to vector<128xf32>
    %62 = vector.shape_cast %61 : vector<128xf32> to vector<1x128xf32>
    %63 = arith.subf %42, %44 : vector<16x128xf32>
    %64 = math.absf %63 : vector<16x128xf32>
    %cst_30 = arith.constant dense<0.000000e+00> : vector<128xf32>
    %65 = vector.multi_reduction <add>, %64, %cst_30 [0] : vector<16x128xf32> to vector<128xf32>
    %66 = vector.shape_cast %65 : vector<128xf32> to vector<1x128xf32>
    %67 = tpu.iota {dimensions = array<i32: 1>} : vector<1x128xi32>
    %c15_i32 = arith.constant 15 : i32
    %68 = vector.broadcast %c15_i32 : i32 to vector<1x128xi32>
    %69 = arith.cmpi slt, %67, %68 : vector<1x128xi32>
    %cst_31 = arith.constant 0.000000e+00 : f32
    %70 = vector.broadcast %cst_31 : f32 to vector<1x128xf32>
    %71 = arith.select %69, %62, %70 : vector<1x128xi1>, vector<1x128xf32>
    %cst_32 = arith.constant 0.000000e+00 : f32
    %72 = vector.broadcast %cst_32 : f32 to vector<1x128xf32>
    %73 = arith.select %69, %66, %72 : vector<1x128xi1>, vector<1x128xf32>
    %74 = vector.extract_strided_slice %1 {offsets = [0, 0], sizes = [15, 128], strides = [1, 1]} : vector<16x128xf32> to vector<15x128xf32>
    %75 = vector.extract_strided_slice %1 {offsets = [1, 0], sizes = [15, 128], strides = [1, 1]} : vector<16x128xf32> to vector<15x128xf32>
    %76 = arith.subf %74, %75 : vector<15x128xf32>
    %77 = vector.extract_strided_slice %3 {offsets = [0, 0], sizes = [15, 128], strides = [1, 1]} : vector<16x128xf32> to vector<15x128xf32>
    %78 = vector.extract_strided_slice %3 {offsets = [1, 0], sizes = [15, 128], strides = [1, 1]} : vector<16x128xf32> to vector<15x128xf32>
    %79 = arith.subf %77, %78 : vector<15x128xf32>
    %80 = vector.extract_strided_slice %5 {offsets = [0, 0], sizes = [15, 128], strides = [1, 1]} : vector<16x128xf32> to vector<15x128xf32>
    %81 = vector.extract_strided_slice %5 {offsets = [1, 0], sizes = [15, 128], strides = [1, 1]} : vector<16x128xf32> to vector<15x128xf32>
    %82 = arith.subf %80, %81 : vector<15x128xf32>
    %83 = math.absf %82 : vector<15x128xf32>
    %84 = vector.extract_strided_slice %7 {offsets = [0, 0], sizes = [15, 128], strides = [1, 1]} : vector<16x128xf32> to vector<15x128xf32>
    %85 = vector.extract_strided_slice %7 {offsets = [1, 0], sizes = [15, 128], strides = [1, 1]} : vector<16x128xf32> to vector<15x128xf32>
    %86 = arith.subf %84, %85 : vector<15x128xf32>
    %87 = math.absf %86 : vector<15x128xf32>
    %88 = arith.addf %83, %87 : vector<15x128xf32>
    %89 = vector.extract_strided_slice %9 {offsets = [0, 0], sizes = [15, 128], strides = [1, 1]} : vector<16x128xf32> to vector<15x128xf32>
    %90 = vector.extract_strided_slice %9 {offsets = [1, 0], sizes = [15, 128], strides = [1, 1]} : vector<16x128xf32> to vector<15x128xf32>
    %91 = arith.subf %89, %90 : vector<15x128xf32>
    %92 = math.absf %91 : vector<15x128xf32>
    %93 = arith.addf %88, %92 : vector<15x128xf32>
    %cst_33 = arith.constant -0.333333343 : f32
    %94 = vector.broadcast %cst_33 : f32 to vector<15x128xf32>
    %95 = arith.mulf %94, %93 : vector<15x128xf32>
    %96 = math.exp %95 : vector<15x128xf32>
    %97 = math.absf %76 : vector<15x128xf32>
    %98 = arith.mulf %96, %97 : vector<15x128xf32>
    %cst_34 = arith.constant dense<0.000000e+00> : vector<128xf32>
    %99 = vector.multi_reduction <add>, %98, %cst_34 [0] : vector<15x128xf32> to vector<128xf32>
    %100 = vector.shape_cast %99 : vector<128xf32> to vector<1x128xf32>
    %101 = arith.subf %76, %79 : vector<15x128xf32>
    %102 = math.absf %101 : vector<15x128xf32>
    %cst_35 = arith.constant dense<0.000000e+00> : vector<128xf32>
    %103 = vector.multi_reduction <add>, %102, %cst_35 [0] : vector<15x128xf32> to vector<128xf32>
    %104 = vector.shape_cast %103 : vector<128xf32> to vector<1x128xf32>
    %c0_36 = arith.constant 0 : index
    %c0_37 = arith.constant 0 : index
    %105 = vector.load %arg6[%c0_36, %c0_37] : memref<8x128xf32, #tpu.memory_space<vmem>>, vector<8x128xf32>
    %106 = vector.extract_strided_slice %105 {offsets = [0, 0], sizes = [1, 128], strides = [1, 1]} : vector<8x128xf32> to vector<1x128xf32>
    %107 = vector.extract_strided_slice %1 {offsets = [0, 0], sizes = [1, 128], strides = [1, 1]} : vector<16x128xf32> to vector<1x128xf32>
    %108 = arith.subf %106, %107 : vector<1x128xf32>
    %109 = vector.extract_strided_slice %105 {offsets = [1, 0], sizes = [1, 128], strides = [1, 1]} : vector<8x128xf32> to vector<1x128xf32>
    %110 = vector.extract_strided_slice %3 {offsets = [0, 0], sizes = [1, 128], strides = [1, 1]} : vector<16x128xf32> to vector<1x128xf32>
    %111 = arith.subf %109, %110 : vector<1x128xf32>
    %112 = vector.extract_strided_slice %105 {offsets = [2, 0], sizes = [1, 128], strides = [1, 1]} : vector<8x128xf32> to vector<1x128xf32>
    %113 = vector.extract_strided_slice %5 {offsets = [0, 0], sizes = [1, 128], strides = [1, 1]} : vector<16x128xf32> to vector<1x128xf32>
    %114 = arith.subf %112, %113 : vector<1x128xf32>
    %115 = math.absf %114 : vector<1x128xf32>
    %116 = vector.extract_strided_slice %105 {offsets = [3, 0], sizes = [1, 128], strides = [1, 1]} : vector<8x128xf32> to vector<1x128xf32>
    %117 = vector.extract_strided_slice %7 {offsets = [0, 0], sizes = [1, 128], strides = [1, 1]} : vector<16x128xf32> to vector<1x128xf32>
    %118 = arith.subf %116, %117 : vector<1x128xf32>
    %119 = math.absf %118 : vector<1x128xf32>
    %120 = arith.addf %115, %119 : vector<1x128xf32>
    %121 = vector.extract_strided_slice %105 {offsets = [4, 0], sizes = [1, 128], strides = [1, 1]} : vector<8x128xf32> to vector<1x128xf32>
    %122 = vector.extract_strided_slice %9 {offsets = [0, 0], sizes = [1, 128], strides = [1, 1]} : vector<16x128xf32> to vector<1x128xf32>
    %123 = arith.subf %121, %122 : vector<1x128xf32>
    %124 = math.absf %123 : vector<1x128xf32>
    %125 = arith.addf %120, %124 : vector<1x128xf32>
    %cst_38 = arith.constant -0.333333343 : f32
    %126 = vector.broadcast %cst_38 : f32 to vector<1x128xf32>
    %127 = arith.mulf %126, %125 : vector<1x128xf32>
    %128 = math.exp %127 : vector<1x128xf32>
    %129 = math.absf %108 : vector<1x128xf32>
    %130 = arith.mulf %128, %129 : vector<1x128xf32>
    %131 = arith.addf %100, %130 : vector<1x128xf32>
    %132 = arith.subf %108, %111 : vector<1x128xf32>
    %133 = math.absf %132 : vector<1x128xf32>
    %134 = arith.addf %104, %133 : vector<1x128xf32>
    %c0_39 = arith.constant 0 : index
    %c0_40 = arith.constant 0 : index
    %c0_41 = arith.constant 0 : index
    %135 = vector.load %arg5[%c0_39, %c0_40, %c0_41] : memref<1x8x128xf32, #tpu.memory_space<vmem>>, vector<1x8x128xf32>
    %136 = vector.shape_cast %135 : vector<1x8x128xf32> to vector<8x128xf32>
    %137 = tpu.iota {dimensions = array<i32: 0>} : vector<8x1xi32>
    %cst_42 = arith.constant 0.000000e+00 : f32
    %138 = vector.broadcast %cst_42 : f32 to vector<8x128xf32>
    %c0_i32_43 = arith.constant 0 : i32
    %139 = vector.broadcast %c0_i32_43 : i32 to vector<8x1xi32>
    %140 = arith.cmpi eq, %137, %139 : vector<8x1xi32>
    %141 = vector.shape_cast %140 : vector<8x1xi1> to vector<8x1xi1>
    %142 = vector.broadcast %141 : vector<8x1xi1> to vector<8x128xi1>
    %143 = vector.shape_cast %33 : vector<1x128xf32> to vector<1x128xf32>
    %144 = vector.broadcast %143 : vector<1x128xf32> to vector<8x128xf32>
    %145 = arith.select %142, %144, %138 : vector<8x128xi1>, vector<8x128xf32>
    %c1_i32 = arith.constant 1 : i32
    %146 = vector.broadcast %c1_i32 : i32 to vector<8x1xi32>
    %147 = arith.cmpi eq, %137, %146 : vector<8x1xi32>
    %148 = vector.shape_cast %147 : vector<8x1xi1> to vector<8x1xi1>
    %149 = vector.broadcast %148 : vector<8x1xi1> to vector<8x128xi1>
    %150 = vector.shape_cast %36 : vector<1x128xf32> to vector<1x128xf32>
    %151 = vector.broadcast %150 : vector<1x128xf32> to vector<8x128xf32>
    %152 = arith.select %149, %151, %145 : vector<8x128xi1>, vector<8x128xf32>
    %c2_i32 = arith.constant 2 : i32
    %153 = vector.broadcast %c2_i32 : i32 to vector<8x1xi32>
    %154 = arith.cmpi eq, %137, %153 : vector<8x1xi32>
    %155 = vector.shape_cast %154 : vector<8x1xi1> to vector<8x1xi1>
    %156 = vector.broadcast %155 : vector<8x1xi1> to vector<8x128xi1>
    %157 = vector.shape_cast %40 : vector<1x128xf32> to vector<1x128xf32>
    %158 = vector.broadcast %157 : vector<1x128xf32> to vector<8x128xf32>
    %159 = arith.select %156, %158, %152 : vector<8x128xi1>, vector<8x128xf32>
    %c3_i32 = arith.constant 3 : i32
    %160 = vector.broadcast %c3_i32 : i32 to vector<8x1xi32>
    %161 = arith.cmpi eq, %137, %160 : vector<8x1xi32>
    %162 = vector.shape_cast %161 : vector<8x1xi1> to vector<8x1xi1>
    %163 = vector.broadcast %162 : vector<8x1xi1> to vector<8x128xi1>
    %164 = vector.shape_cast %71 : vector<1x128xf32> to vector<1x128xf32>
    %165 = vector.broadcast %164 : vector<1x128xf32> to vector<8x128xf32>
    %166 = arith.select %163, %165, %159 : vector<8x128xi1>, vector<8x128xf32>
    %c4_i32 = arith.constant 4 : i32
    %167 = vector.broadcast %c4_i32 : i32 to vector<8x1xi32>
    %168 = arith.cmpi eq, %137, %167 : vector<8x1xi32>
    %169 = vector.shape_cast %168 : vector<8x1xi1> to vector<8x1xi1>
    %170 = vector.broadcast %169 : vector<8x1xi1> to vector<8x128xi1>
    %171 = vector.shape_cast %131 : vector<1x128xf32> to vector<1x128xf32>
    %172 = vector.broadcast %171 : vector<1x128xf32> to vector<8x128xf32>
    %173 = arith.select %170, %172, %166 : vector<8x128xi1>, vector<8x128xf32>
    %c5_i32 = arith.constant 5 : i32
    %174 = vector.broadcast %c5_i32 : i32 to vector<8x1xi32>
    %175 = arith.cmpi eq, %137, %174 : vector<8x1xi32>
    %176 = vector.shape_cast %175 : vector<8x1xi1> to vector<8x1xi1>
    %177 = vector.broadcast %176 : vector<8x1xi1> to vector<8x128xi1>
    %178 = vector.shape_cast %73 : vector<1x128xf32> to vector<1x128xf32>
    %179 = vector.broadcast %178 : vector<1x128xf32> to vector<8x128xf32>
    %180 = arith.select %177, %179, %173 : vector<8x128xi1>, vector<8x128xf32>
    %c6_i32 = arith.constant 6 : i32
    %181 = vector.broadcast %c6_i32 : i32 to vector<8x1xi32>
    %182 = arith.cmpi eq, %137, %181 : vector<8x1xi32>
    %183 = vector.shape_cast %182 : vector<8x1xi1> to vector<8x1xi1>
    %184 = vector.broadcast %183 : vector<8x1xi1> to vector<8x128xi1>
    %185 = vector.shape_cast %134 : vector<1x128xf32> to vector<1x128xf32>
    %186 = vector.broadcast %185 : vector<1x128xf32> to vector<8x128xf32>
    %187 = arith.select %184, %186, %180 : vector<8x128xi1>, vector<8x128xf32>
    %188 = arith.addf %136, %187 : vector<8x128xf32>
    %c0_44 = arith.constant 0 : index
    %c0_45 = arith.constant 0 : index
    %c0_46 = arith.constant 0 : index
    %189 = vector.load %arg5[%c0_44, %c0_45, %c0_46] : memref<1x8x128xf32, #tpu.memory_space<vmem>>, vector<1x8x128xf32>
    %190 = vector.shape_cast %189 : vector<1x8x128xf32> to vector<8x128xf32>
    %191 = vector.shape_cast %188 : vector<8x128xf32> to vector<1x8x128xf32>
    tpu.vector_store %arg5[%c0_44, %c0_45, %c0_46], %191 {strides = array<i32>} : memref<1x8x128xf32, #tpu.memory_space<vmem>>, vector<1x8x128xf32>,
    %192 = vector.extract_strided_slice %1 {offsets = [15, 0], sizes = [1, 128], strides = [1, 1]} : vector<16x128xf32> to vector<1x128xf32>
    %193 = vector.extract_strided_slice %3 {offsets = [15, 0], sizes = [1, 128], strides = [1, 1]} : vector<16x128xf32> to vector<1x128xf32>
    %194 = vector.extract_strided_slice %5 {offsets = [15, 0], sizes = [1, 128], strides = [1, 1]} : vector<16x128xf32> to vector<1x128xf32>
    %195 = vector.extract_strided_slice %7 {offsets = [15, 0], sizes = [1, 128], strides = [1, 1]} : vector<16x128xf32> to vector<1x128xf32>
    %196 = vector.extract_strided_slice %9 {offsets = [15, 0], sizes = [1, 128], strides = [1, 1]} : vector<16x128xf32> to vector<1x128xf32>
    %197 = tpu.iota {dimensions = array<i32: 0>} : vector<8x1xi32>
    %cst_47 = arith.constant 0.000000e+00 : f32
    %198 = vector.broadcast %cst_47 : f32 to vector<8x128xf32>
    %c0_i32_48 = arith.constant 0 : i32
    %199 = vector.broadcast %c0_i32_48 : i32 to vector<8x1xi32>
    %200 = arith.cmpi eq, %197, %199 : vector<8x1xi32>
    %201 = vector.shape_cast %200 : vector<8x1xi1> to vector<8x1xi1>
    %202 = vector.broadcast %201 : vector<8x1xi1> to vector<8x128xi1>
    %203 = vector.shape_cast %192 : vector<1x128xf32> to vector<1x128xf32>
    %204 = vector.broadcast %203 : vector<1x128xf32> to vector<8x128xf32>
    %205 = arith.select %202, %204, %198 : vector<8x128xi1>, vector<8x128xf32>
    %c1_i32_49 = arith.constant 1 : i32
    %206 = vector.broadcast %c1_i32_49 : i32 to vector<8x1xi32>
    %207 = arith.cmpi eq, %197, %206 : vector<8x1xi32>
    %208 = vector.shape_cast %207 : vector<8x1xi1> to vector<8x1xi1>
    %209 = vector.broadcast %208 : vector<8x1xi1> to vector<8x128xi1>
    %210 = vector.shape_cast %193 : vector<1x128xf32> to vector<1x128xf32>
    %211 = vector.broadcast %210 : vector<1x128xf32> to vector<8x128xf32>
    %212 = arith.select %209, %211, %205 : vector<8x128xi1>, vector<8x128xf32>
    %c2_i32_50 = arith.constant 2 : i32
    %213 = vector.broadcast %c2_i32_50 : i32 to vector<8x1xi32>
    %214 = arith.cmpi eq, %197, %213 : vector<8x1xi32>
    %215 = vector.shape_cast %214 : vector<8x1xi1> to vector<8x1xi1>
    %216 = vector.broadcast %215 : vector<8x1xi1> to vector<8x128xi1>
    %217 = vector.shape_cast %194 : vector<1x128xf32> to vector<1x128xf32>
    %218 = vector.broadcast %217 : vector<1x128xf32> to vector<8x128xf32>
    %219 = arith.select %216, %218, %212 : vector<8x128xi1>, vector<8x128xf32>
    %c3_i32_51 = arith.constant 3 : i32
    %220 = vector.broadcast %c3_i32_51 : i32 to vector<8x1xi32>
    %221 = arith.cmpi eq, %197, %220 : vector<8x1xi32>
    %222 = vector.shape_cast %221 : vector<8x1xi1> to vector<8x1xi1>
    %223 = vector.broadcast %222 : vector<8x1xi1> to vector<8x128xi1>
    %224 = vector.shape_cast %195 : vector<1x128xf32> to vector<1x128xf32>
    %225 = vector.broadcast %224 : vector<1x128xf32> to vector<8x128xf32>
    %226 = arith.select %223, %225, %219 : vector<8x128xi1>, vector<8x128xf32>
    %c4_i32_52 = arith.constant 4 : i32
    %227 = vector.broadcast %c4_i32_52 : i32 to vector<8x1xi32>
    %228 = arith.cmpi eq, %197, %227 : vector<8x1xi32>
    %229 = vector.shape_cast %228 : vector<8x1xi1> to vector<8x1xi1>
    %230 = vector.broadcast %229 : vector<8x1xi1> to vector<8x128xi1>
    %231 = vector.shape_cast %196 : vector<1x128xf32> to vector<1x128xf32>
    %232 = vector.broadcast %231 : vector<1x128xf32> to vector<8x128xf32>
    %233 = arith.select %230, %232, %226 : vector<8x128xi1>, vector<8x128xf32>
    %c0_53 = arith.constant 0 : index
    %c0_54 = arith.constant 0 : index
    %234 = vector.load %arg6[%c0_53, %c0_54] : memref<8x128xf32, #tpu.memory_space<vmem>>, vector<8x128xf32>
    tpu.vector_store %arg6[%c0_53, %c0_54], %233 {strides = array<i32>} : memref<8x128xf32, #tpu.memory_space<vmem>>, vector<8x128xf32>,
    return
  }
  func.func @transform_0(%arg0: i32, %arg1: i32) -> (i32, i32, i32) {
    %c0_i32 = arith.constant 0 : i32
    %c0_i32_0 = arith.constant 0 : i32
    return %arg0, %arg1, %c0_i32 : i32, i32, i32
  }
  func.func @transform_1(%arg0: i32, %arg1: i32) -> (i32, i32, i32) {
    %c0_i32 = arith.constant 0 : i32
    %c0_i32_0 = arith.constant 0 : i32
    return %arg0, %arg1, %c0_i32 : i32, i32, i32
  }
  func.func @transform_2(%arg0: i32, %arg1: i32) -> (i32, i32, i32, i32) {
    %c0_i32 = arith.constant 0 : i32
    %c0_i32_0 = arith.constant 0 : i32
    %c0_i32_1 = arith.constant 0 : i32
    return %arg0, %c0_i32, %arg1, %c0_i32_0 : i32, i32, i32, i32
  }
  func.func @transform_3(%arg0: i32, %arg1: i32) -> (i32, i32, i32) {
    %c0_i32 = arith.constant 0 : i32
    %c0_i32_0 = arith.constant 0 : i32
    %c0_i32_1 = arith.constant 0 : i32
    return %arg0, %c0_i32, %c0_i32_0 : i32, i32, i32
  }
}

</mosaic_0001>

<llo_original>
// kernel: tpu_custom_call.1
$region0: #{tpu_custom_call.1}
  #allocation0 [shape = 'u32[]', space=smem, size = 0x4, offset = 0x4, fixed_abs, tag = 'smem constant byte address 0x4 - core index']
  #allocation1 [shape = 'u32[144,128]{1,0:T(1,128)}', space=vmem, size = 0x12000, scoped, tag = 'internal scratch']
  #allocation2 [shape = 'f32[8,128]{1,0:T(8,128)}', space=vmem, size = 0x1000, scoped, tag = 'scratch operand']
  %s0 = inlined_call_operand.hbm [shape: f32[2,16,128], index: 0, kind: input, shape index: {}]
  %s1 = inlined_call_operand.hbm [shape: f32[2,16,128], index: 1, kind: input, shape index: {}]
  %s2 = inlined_call_operand.hbm [shape: f32[2,3,16,128], index: 2, kind: input, shape index: {}]
  %s3 = inlined_call_operand.hbm [shape: f32[2,8,128], index: 3, kind: output, shape index: {}]
  %s4 = sld [smem:[#allocation0]]
  $region61: #{tpu_custom_call.1} parent=0
    _
  %s6 = ssub.s32 1, %s4
  %s7 = scalar_select 0, %s6, %s4
  $region1: #{tpu_custom_call.1} parent=0
    #allocation3 [shape = 'u8[16384]{0}', space=vmem, size = 0x4000, scoped, tag = 'input window, operand 0']
    #allocation4 [shape = 's32[2]{0}', space=sflag, size = 0x8, scoped, tag = 'scoped memory for tpu_custom_call.1']
    #allocation5 [shape = 's32[2]{0}', space=sflag, size = 0x8, scoped, tag = 'scoped memory for tpu_custom_call.1']
    #allocation6 [shape = 'u8[16384]{0}', space=vmem, size = 0x4000, scoped, tag = 'input window, operand 1']
    #allocation7 [shape = 's32[2]{0}', space=sflag, size = 0x8, scoped, tag = 'scoped memory for tpu_custom_call.1']
    #allocation8 [shape = 'u8[49152]{0}', space=vmem, size = 0xc000, scoped, tag = 'input window, operand 2']
    #allocation9 [shape = 'u8[8192]{0}', space=vmem, size = 0x2000, scoped, tag = 'output window, operand 0']
    %8 = vsyncpa [#allocation4], 0
    %s9 = scalar_lea.sflag [#allocation4], 1
    %10 = vsyncpa %s9, 0
    %11 = vsyncpa [#allocation7], 0
    %s12 = scalar_lea.sflag [#allocation7], 1
    %13 = vsyncpa %s12, 0
    %14 = vsyncpa [#allocation5], 0
    %s15 = scalar_lea.sflag [#allocation5], 1
    %16 = vsyncpa %s15, 0
    loop: start=0, step=1, limit=4
    $region2: #{tpu_custom_call.1} parent=1 // loop_pre_header
      _
    $region3: #{tpu_custom_call.1} parent=1 // loop_header
      %s18 = sphi 0, %s22
      %p19 = scmp.ge.s32.totalorder %s18, 4
      %s25 = sphi 0, %s37
      %s26 = sphi 0, %s33
      %s27 = sphi 0, %s25
      %s28 = sphi 0, %s26
      %s29 = sphi 0, %s27
      %s30 = sphi 0, %s28
      %s42 = sphi 0, %s44
      %s45 = sphi 0, %s42
      %s46 = sphi 0, %s45
      %s62 = sphi 0, %s46
      %s70 = sphi 0, %s72
      %s73 = sphi 0, %s70
      %s74 = sphi 0, %s73
      %s90 = sphi 0, %s74
      %s98 = sphi 0, %s100
      %s101 = sphi 0, %s98
      %s102 = sphi 0, %s101
      %s118 = sphi 0, %s102
      %s124 = sphi 0, %s126
      %s127 = sphi 0, %s124
      %s128 = sphi 0, %s127
      %s144 = sphi 0, %s128
    $region4: #{tpu_custom_call.1} parent=1 // loop_header_branch
      %21 = sbr.rel (%p19) target = $region8
    $region5: #{tpu_custom_call.1} parent=1 // loop_body
      %s23 = ssub.s32 %s18, 1
      %s24 = ssub.s32 %s18, 2
      %s31 = sadd.s32 1, %s26
      %p32 = scmp.ge.s32.totalorder %s31, 1
      %s33 = scalar_select %p32, 0, %s31
      %s34 = sadd.s32 1, %s25
      %s35 = scalar_select %p32, %s34, %s25
      %p36 = scmp.ge.s32.totalorder %s35, 2
      %s37 = scalar_select %p36, 0, %s35
      %s38 = ssub.s32 %s25, %s37
      %s39 = ssub.s32 %s26, %s33
      %s40 = sor.u32 %s38, %s39
      %p41 = scmp.eq.s32.totalorder %s40, 0
      %s43 = sadd.s32 %s42, 1
      %s44 = scalar_select %p41, %s42, %s43
      %p47 = pneg %p41
      %p48 = scmp.eq.s32.totalorder %s18, 1
      %p49 = por %p47, %p48
      %p50 = scmp.ne.s32.totalorder %s42, %s45
      %p51 = scmp.eq.s32.totalorder %s18, 0
      %p52 = por %p50, %p51
      %p53 = scmp.ne.s32.totalorder %s42, %s45
      %p54 = scmp.eq.s32.totalorder %s23, 1
      %p55 = por %p53, %p54
      %p56 = scmp.ne.s32.totalorder %s45, %s46
      %p57 = scmp.eq.s32.totalorder %s23, 0
      %p58 = por %p56, %p57
      %p59 = scmp.ne.s32.totalorder %s45, %s46
      %p60 = scmp.eq.s32.totalorder %s24, 1
      %p61 = por %p59, %p60
      %p63 = scmp.ne.s32.totalorder %s46, %s62
      %p64 = scmp.eq.s32.totalorder %s24, 0
      %p65 = por %p63, %p64
      %s66 = ssub.s32 %s25, %s37
      %s67 = ssub.s32 %s26, %s33
      %s68 = sor.u32 %s66, %s67
      %p69 = scmp.eq.s32.totalorder %s68, 0
      %s71 = sadd.s32 %s70, 1
      %s72 = scalar_select %p69, %s70, %s71
      %p75 = pneg %p69
      %p76 = scmp.eq.s32.totalorder %s18, 1
      %p77 = por %p75, %p76
      %p78 = scmp.ne.s32.totalorder %s70, %s73
      %p79 = scmp.eq.s32.totalorder %s18, 0
      %p80 = por %p78, %p79
      %p81 = scmp.ne.s32.totalorder %s70, %s73
      %p82 = scmp.eq.s32.totalorder %s23, 1
      %p83 = por %p81, %p82
      %p84 = scmp.ne.s32.totalorder %s73, %s74
      %p85 = scmp.eq.s32.totalorder %s23, 0
      %p86 = por %p84, %p85
      %p87 = scmp.ne.s32.totalorder %s73, %s74
      %p88 = scmp.eq.s32.totalorder %s24, 1
      %p89 = por %p87, %p88
      %p91 = scmp.ne.s32.totalorder %s74, %s90
      %p92 = scmp.eq.s32.totalorder %s24, 0
      %p93 = por %p91, %p92
      %s94 = ssub.s32 %s25, %s37
      %s95 = ssub.s32 %s26, %s33
      %s96 = sor.u32 %s94, %s95
      %p97 = scmp.eq.s32.totalorder %s96, 0
      %s99 = sadd.s32 %s98, 1
      %s100 = scalar_select %p97, %s98, %s99
      %p103 = pneg %p97
      %p104 = scmp.eq.s32.totalorder %s18, 1
      %p105 = por %p103, %p104
      %p106 = scmp.ne.s32.totalorder %s98, %s101
      %p107 = scmp.eq.s32.totalorder %s18, 0
      %p108 = por %p106, %p107
      %p109 = scmp.ne.s32.totalorder %s98, %s101
      %p110 = scmp.eq.s32.totalorder %s23, 1
      %p111 = por %p109, %p110
      %p112 = scmp.ne.s32.totalorder %s101, %s102
      %p113 = scmp.eq.s32.totalorder %s23, 0
      %p114 = por %p112, %p113
      %p115 = scmp.ne.s32.totalorder %s101, %s102
      %p116 = scmp.eq.s32.totalorder %s24, 1
      %p117 = por %p115, %p116
      %p119 = scmp.ne.s32.totalorder %s102, %s118
      %p120 = scmp.eq.s32.totalorder %s24, 0
      %p121 = por %p119, %p120
      %s122 = ssub.s32 %s25, %s37
      %p123 = scmp.eq.s32.totalorder %s122, 0
      %s125 = sadd.s32 %s124, 1
      %s126 = scalar_select %p123, %s124, %s125
      %p129 = pneg %p123
      %p130 = scmp.eq.s32.totalorder %s18, 1
      %p131 = por %p129, %p130
      %p132 = scmp.ne.s32.totalorder %s124, %s127
      %p133 = scmp.eq.s32.totalorder %s18, 0
      %p134 = por %p132, %p133
      %p135 = scmp.ne.s32.totalorder %s124, %s127
      %p136 = scmp.eq.s32.totalorder %s23, 1
      %p137 = por %p135, %p136
      %p138 = scmp.ne.s32.totalorder %s127, %s128
      %p139 = scmp.eq.s32.totalorder %s23, 0
      %p140 = por %p138, %p139
      %p141 = scmp.ne.s32.totalorder %s127, %s128
      %p142 = scmp.eq.s32.totalorder %s24, 1
      %p143 = por %p141, %p142
      %p145 = scmp.ne.s32.totalorder %s128, %s144
      %p146 = scmp.eq.s32.totalorder %s24, 0
      %p147 = por %p145, %p146
      %p148 = scmp.le.s32.totalorder 1, %s18
      %p149 = scmp.lt.s32.totalorder %s18, 3
      %p150 = pnand %p148, %p149
      %p151 = pneg %p150
      // Predicated region
      $region9: #{tpu_custom_call.1} parent=5 // pred_check
        _
      $region10: #{tpu_custom_call.1} parent=5 // pred_check_branch
        %153 = sbr.rel (%p150) target = $region12
      $region11: #{tpu_custom_call.1} parent=5 // pred_region
        %s154 = ssub.s32 %s18, 1
      $region12: #{tpu_custom_call.1} parent=5 // pred_fallthru
        _
      %p155 = scmp.lt.s32.totalorder %s18, 2
      // Predicated region
      $region13: #{tpu_custom_call.1} parent=5 // pred_check
        %p156 = pneg %p155
      $region14: #{tpu_custom_call.1} parent=5 // pred_check_branch
        %158 = sbr.rel (%p156) target = $region16
      $region15: #{tpu_custom_call.1} parent=5 // pred_region
        // Predicated region
        $region17: #{tpu_custom_call.1} parent=15 // pred_check
          %p159 = pneg %p52
        $region18: #{tpu_custom_call.1} parent=15 // pred_check_branch
          %161 = sbr.rel (%p159) target = $region20
        $region19: #{tpu_custom_call.1} parent=15 // pred_region
          %s162 = sand.u32 %s42, 1
          %s163 = scalar_lea.sflag [#allocation4], %s162
          %s164 = sand.u32 %s42, 1
          %s165 = smul.addr %s164, 16
          %s166 = scalar_lea.vmem [#allocation3], %s165
          %s167 = smul.u32 2, %s26
          %s169 = ssub.s32 256, 256
          %170 = vsyncadd %s163, %s169
          %s171 = smul.addr %s25, 2
          %s172 = sadd.s32 %s167, %s171
          %s173 = smul.addr %s172, 128
          %s174 = scalar_lea.hbm %s0, %s173
          %s175 = sshll.u32 %s166, 4
          %s176 = int_to_ptr.vmem [resolvable:$true] %s175
          %181 = dma.hbm_to_vmem [thread:$0]  %s174, 256, %s176, %s163, 128, 128, 8
        $region20: #{tpu_custom_call.1} parent=15 // pred_fallthru
          _
        // Predicated region
        $region21: #{tpu_custom_call.1} parent=15 // pred_check
          %p182 = pneg %p80
        $region22: #{tpu_custom_call.1} parent=15 // pred_check_branch
          %184 = sbr.rel (%p182) target = $region24
        $region23: #{tpu_custom_call.1} parent=15 // pred_region
          %s185 = sand.u32 %s18, 1
          %s186 = scalar_lea.sflag [#allocation7], %s185
          %s187 = sand.u32 %s70, 1
          %s188 = smul.addr %s187, 16
          %s189 = scalar_lea.vmem [#allocation6], %s188
          %s190 = smul.u32 2, %s26
          %s192 = ssub.s32 256, 256
          %193 = vsyncadd %s186, %s192
          %s194 = smul.addr %s25, 2
          %s195 = sadd.s32 %s190, %s194
          %s196 = smul.addr %s195, 128
          %s197 = scalar_lea.hbm %s1, %s196
          %s198 = sshll.u32 %s189, 4
          %s199 = int_to_ptr.vmem [resolvable:$true] %s198
          %204 = dma.hbm_to_vmem [thread:$0]  %s197, 256, %s199, %s186, 128, 128, 8
        $region24: #{tpu_custom_call.1} parent=15 // pred_fallthru
          _
        // Predicated region
        $region25: #{tpu_custom_call.1} parent=15 // pred_check
          %p205 = pneg %p108
        $region26: #{tpu_custom_call.1} parent=15 // pred_check_branch
          %207 = sbr.rel (%p205) target = $region28
        $region27: #{tpu_custom_call.1} parent=15 // pred_region
          %s208 = sand.u32 %s18, 1
          %s209 = scalar_lea.sflag [#allocation7], %s208
          %s210 = sand.u32 %s98, 1
          %s211 = smul.addr %s210, 48
          %s212 = scalar_lea.vmem [#allocation8], %s211
          %s213 = smul.u32 2, %s26
          %s215 = ssub.s32 768, 768
          %216 = vsyncadd %s209, %s215
          %s217 = smul.addr %s25, 6
          %s218 = sadd.s32 %s213, %s217
          %s219 = smul.addr %s218, 128
          %s220 = scalar_lea.hbm %s2, %s219
          %s221 = sshll.u32 %s212, 4
          %s222 = int_to_ptr.vmem [resolvable:$true] %s221
          %227 = dma.hbm_to_vmem [thread:$0]  %s220, 768, %s222, %s209, 128, 128, 8
        $region28: #{tpu_custom_call.1} parent=15 // pred_fallthru
          _
      $region16: #{tpu_custom_call.1} parent=5 // pred_fallthru
        _
      %p228 = scmp.le.s32.totalorder 1, %s18
      %p229 = scmp.lt.s32.totalorder %s18, 3
      %p230 = pnand %p228, %p229
      %p231 = pneg %p230
      // Predicated region
      $region29: #{tpu_custom_call.1} parent=5 // pred_check
        _
      $region30: #{tpu_custom_call.1} parent=5 // pred_check_branch
        %233 = sbr.rel (%p230) target = $region32
      $region31: #{tpu_custom_call.1} parent=5 // pred_region
        %s234 = ssub.s32 %s18, 1
        %s235 = sand.u32 %s45, 1
        %s236 = scalar_lea.sflag [#allocation4], %s235
        %s237 = sand.u32 %s45, 1
        %s238 = smul.addr %s237, 16
        %s239 = scalar_lea.vmem [#allocation3], %s238
        // Predicated region
        $region33: #{tpu_custom_call.1} parent=31 // pred_check
          %p240 = pneg %p58
        $region34: #{tpu_custom_call.1} parent=31 // pred_check_branch
          %242 = sbr.rel (%p240) target = $region36
        $region35: #{tpu_custom_call.1} parent=31 // pred_region
          %243 = dma.done %s236, 256
        $region36: #{tpu_custom_call.1} parent=31 // pred_fallthru
          _
        %s244 = sand.u32 %s23, 1
        %s245 = scalar_lea.sflag [#allocation7], %s244
        %s246 = sand.u32 %s73, 1
        %s247 = smul.addr %s246, 16
        %s248 = scalar_lea.vmem [#allocation6], %s247
        // Predicated region
        $region37: #{tpu_custom_call.1} parent=31 // pred_check
          %p249 = pneg %p86
        $region38: #{tpu_custom_call.1} parent=31 // pred_check_branch
          %251 = sbr.rel (%p249) target = $region40
        $region39: #{tpu_custom_call.1} parent=31 // pred_region
          %252 = dma.done %s245, 256
        $region40: #{tpu_custom_call.1} parent=31 // pred_fallthru
          _
        %s253 = sand.u32 %s23, 1
        %s254 = scalar_lea.sflag [#allocation7], %s253
        %s255 = sand.u32 %s101, 1
        %s256 = smul.addr %s255, 48
        %s257 = scalar_lea.vmem [#allocation8], %s256
        // Predicated region
        $region41: #{tpu_custom_call.1} parent=31 // pred_check
          %p258 = pneg %p114
        $region42: #{tpu_custom_call.1} parent=31 // pred_check_branch
          %260 = sbr.rel (%p258) target = $region44
        $region43: #{tpu_custom_call.1} parent=31 // pred_region
          %261 = dma.done %s254, 768
        $region44: #{tpu_custom_call.1} parent=31 // pred_fallthru
          _
        %s262 = sand.u32 %s45, 1
        %s263 = scalar_lea.sflag [#allocation4], %s262
        %s264 = sand.u32 %s45, 1
        %s265 = smul.addr %s264, 16
        %s266 = scalar_lea.vmem [#allocation3], %s265
        %p267 = pneg %p58
        %p268 = pneg %p55
        %s269 = sand.u32 %s23, 1
        %s270 = scalar_lea.sflag [#allocation7], %s269
        %s271 = sand.u32 %s73, 1
        %s272 = smul.addr %s271, 16
        %s273 = scalar_lea.vmem [#allocation6], %s272
        %p274 = pneg %p86
        %p275 = pneg %p83
        %s276 = sand.u32 %s23, 1
        %s277 = scalar_lea.sflag [#allocation7], %s276
        %s278 = sand.u32 %s101, 1
        %s279 = smul.addr %s278, 48
        %s280 = scalar_lea.vmem [#allocation8], %s279
        %p281 = pneg %p114
        %p282 = pneg %p111
        %p283 = pneg %p140
        %p284 = pneg %p137
        %s285 = sand.u32 %s127, 1
        %s286 = scalar_lea.sflag [#allocation5], %s285
        %s287 = sand.u32 %s127, 1
        %s288 = smul.addr %s287, 8
        %s289 = scalar_lea.vmem [#allocation9], %s288
        %s290 = smul.u32 2, %s28
        %s291 = smul.u32 2, %s28
        %s292 = smul.u32 2, %s28
        %v293 = vld [vmem:[%s239] sm:$0xff]
        %v294 = vld [vmem:[%s239 + $0x8] sm:$0xff]
        %v295 = vld [vmem:[%s248] sm:$0xff]
        %v296 = vld [vmem:[%s248 + $0x8] sm:$0xff]
        %v297 = vld [vmem:[%s257] sm:$0xff]
        %v298 = vld [vmem:[%s257 + $0x8] sm:$0xff]
        %s299 = scalar_lea.vmem %s257, 16 [#allocation8]
        %v300 = vld [vmem:[%s299] sm:$0xff]
        %v301 = vld [vmem:[%s299 + $0x8] sm:$0xff]
        %s302 = scalar_lea.vmem %s257, 32 [#allocation8]
        %v303 = vld [vmem:[%s302] sm:$0xff]
        %v304 = vld [vmem:[%s302 + $0x8] sm:$0xff]
        %p305 = scmp.eq.s32.totalorder %s28, 0
        // Predicated region
        $region45: #{tpu_custom_call.1} parent=31 // pred_check
          %p306 = pneg %p305
        $region46: #{tpu_custom_call.1} parent=31 // pred_check_branch
          %308 = sbr.rel (%p306) target = $region48
        $region47: #{tpu_custom_call.1} parent=31 // pred_region
          %309 = vst [vmem:[%s289] sm:$0xff] 0.0
          %v310 = vlaneseq
          %v311 = vshrl.u32 %v310, 7
          %vm312 = vcmp.eq.s32.totalorder %v311, 0
          %v313 = vsel %vm312, 1, 0
          %vm314 = vcmp.eq.s32.totalorder %v313, 1
          %v315 = vlaneseq
          %v316 = vshrl.u32 %v315, 7
          %v317 = vsub.s32 0, %v316
          %v318 = vrot.slane %v293, %v317
          %v319 = vsel %vm314, %v318, 0.0
          %vm320 = vcmp.eq.s32.totalorder %v311, 1
          %v321 = vsel %vm320, 1, 0
          %vm322 = vcmp.eq.s32.totalorder %v321, 1
          %v323 = vlaneseq
          %v324 = vshrl.u32 %v323, 7
          %v325 = vsub.s32 0, %v324
          %v326 = vrot.slane %v295, %v325
          %v327 = vsel %vm322, %v326, %v319
          %vm328 = vcmp.eq.s32.totalorder %v311, 2
          %v329 = vsel %vm328, 1, 0
          %vm330 = vcmp.eq.s32.totalorder %v329, 1
          %v331 = vlaneseq
          %v332 = vshrl.u32 %v331, 7
          %v333 = vsub.s32 0, %v332
          %v334 = vrot.slane %v297, %v333
          %v335 = vsel %vm330, %v334, %v327
          %vm336 = vcmp.eq.s32.totalorder %v311, 3
          %v337 = vsel %vm336, 1, 0
          %vm338 = vcmp.eq.s32.totalorder %v337, 1
          %v339 = vlaneseq
          %v340 = vshrl.u32 %v339, 7
          %v341 = vsub.s32 0, %v340
          %v342 = vrot.slane %v300, %v341
          %v343 = vsel %vm338, %v342, %v335
          %vm344 = vcmp.eq.s32.totalorder %v311, 4
          %v345 = vsel %vm344, 1, 0
          %vm346 = vcmp.eq.s32.totalorder %v345, 1
          %v347 = vlaneseq
          %v348 = vshrl.u32 %v347, 7
          %v349 = vsub.s32 0, %v348
          %v350 = vrot.slane %v303, %v349
          %v351 = vsel %vm346, %v350, %v343
          %352 = vst [vmem:[#allocation2] sm:$0xff] %v351
        $region48: #{tpu_custom_call.1} parent=31 // pred_fallthru
          _
        %vm353 = vcmp.gt.f32.partialorder %v295, 1e-07
        %vm354 = vcmp.gt.f32.partialorder %v296, 1e-07
        %v355 = vand.u32 2147483647, %v295
        %v356 = vand.u32 2147483647, %v296
        %vm357 = vcmp.lt.f32.partialorder %v355, inf
        %vm358 = vcmp.lt.f32.partialorder %v356, inf
        %vm359 = vmand %vm353, %vm357
        %vm360 = vmand %vm354, %vm358
        %v361 = vand.u32 2147483647, %v293
        %v362 = vand.u32 2147483647, %v294
        %vm363 = vcmp.lt.f32.partialorder %v361, inf
        %vm364 = vcmp.lt.f32.partialorder %v362, inf
        %vm365 = vmand %vm359, %vm363
        %vm366 = vmand %vm360, %vm364
        %v367 = vadd.f32 %v293, 1e-07
        %v368 = vadd.f32 %v294, 1e-07
        %v369 = vlog2.pop %v367
        %v370 = vmul.f32 %v369, 0.6931472
        %v371 = vlog2.pop %v368
        %v372 = vmul.f32 %v371, 0.6931472
        %v373 = vadd.f32 %v295, 1e-07
        %v374 = vadd.f32 %v296, 1e-07
        %v375 = vlog2.pop %v373
        %v376 = vmul.f32 %v375, 0.6931472
        %v377 = vlog2.pop %v374
        %v378 = vmul.f32 %v377, 0.6931472
        %v379 = vsub.f32 %v370, %v376
        %v380 = vsub.f32 %v372, %v378
        %v381 = vsel %vm365, %v379, 0.0
        %v382 = vsel %vm366, %v380, 0.0
        %v383 = vadd.f32 %v381, %v382
        %v384 = vrot.slane %v383, 4
        %v385 = vadd.f32 %v383, %v384
        %v386 = vrot.slane %v385, 2
        %v387 = vadd.f32 %v385, %v386
        %v388 = vrot.slane %v387, 1
        %v389 = vadd.f32 %v387, %v388
        %v390 = vmul.f32 %v381, %v381
        %v391 = vmul.f32 %v382, %v382
        %v392 = vadd.f32 %v390, %v391
        %v393 = vrot.slane %v392, 4
        %v394 = vadd.f32 %v392, %v393
        %v395 = vrot.slane %v394, 2
        %v396 = vadd.f32 %v394, %v395
        %v397 = vrot.slane %v396, 1
        %v398 = vadd.f32 %v396, %v397
        %v399 = vsel %vm365, 1, 0
        %v400 = vsel %vm366, 1, 0
        %v401 = vcvt.s32.f32 %v399
        %v402 = vcvt.s32.f32 %v400
        %v403 = vadd.f32 %v401, %v402
        %v404 = vrot.slane %v403, 4
        %v405 = vadd.f32 %v403, %v404
        %v406 = vrot.slane %v405, 2
        %v407 = vadd.f32 %v405, %v406
        %v408 = vrot.slane %v407, 1
        %v409 = vadd.f32 %v407, %v408
        %410 = vrot.lane.b32.xlu0 %v293, 127
        %v411 = vpop.permute.xlu0 %410
        %412 = vrot.lane.b32.xlu0 %v294, 127
        %v413 = vpop.permute.xlu0 %412
        %v414 = vsub.f32 %v293, %v411
        %v415 = vsub.f32 %v294, %v413
        %416 = vrot.lane.b32.xlu0 %v295, 127
        %v417 = vpop.permute.xlu0 %416
        %418 = vrot.lane.b32.xlu0 %v296, 127
        %v419 = vpop.permute.xlu0 %418
        %v420 = vsub.f32 %v295, %v417
        %v421 = vsub.f32 %v296, %v419
        %422 = vrot.lane.b32.xlu0 %v297, 127
        %v423 = vpop.permute.xlu0 %422
        %424 = vrot.lane.b32.xlu0 %v298, 127
        %v425 = vpop.permute.xlu0 %424
        %v426 = vsub.f32 %v297, %v423
        %v427 = vsub.f32 %v298, %v425
        %v428 = vand.u32 2147483647, %v426
        %v429 = vand.u32 2147483647, %v427
        %430 = vrot.lane.b32.xlu0 %v300, 127
        %v431 = vpop.permute.xlu0 %430
        %432 = vrot.lane.b32.xlu0 %v301, 127
        %v433 = vpop.permute.xlu0 %432
        %v434 = vsub.f32 %v300, %v431
        %v435 = vsub.f32 %v301, %v433
        %v436 = vand.u32 2147483647, %v434
        %v437 = vand.u32 2147483647, %v435
        %v438 = vadd.f32 %v428, %v436
        %v439 = vadd.f32 %v429, %v437
        %440 = vrot.lane.b32.xlu0 %v303, 127
        %v441 = vpop.permute.xlu0 %440
        %442 = vrot.lane.b32.xlu0 %v304, 127
        %v443 = vpop.permute.xlu0 %442
        %v444 = vsub.f32 %v303, %v441
        %v445 = vsub.f32 %v304, %v443
        %v446 = vand.u32 2147483647, %v444
        %v447 = vand.u32 2147483647, %v445
        %v448 = vadd.f32 %v438, %v446
        %v449 = vadd.f32 %v439, %v447
        %v450 = vmul.f32 %v448, -0.33333334
        %v451 = vmul.f32 %v449, -0.33333334
        %v452 = vmul.f32 %v450, 1.442695
        %v453 = vpow.pop %v452
        %v454 = vmul.f32 %v451, 1.442695
        %v455 = vpow.pop %v454
        %v456 = vand.u32 2147483647, %v414
        %v457 = vand.u32 2147483647, %v415
        %v458 = vmul.f32 %v453, %v456
        %v459 = vmul.f32 %v455, %v457
        %v460 = vadd.f32 %v458, %v459
        %v461 = vrot.slane %v460, 4
        %v462 = vadd.f32 %v460, %v461
        %v463 = vrot.slane %v462, 2
        %v464 = vadd.f32 %v462, %v463
        %v465 = vrot.slane %v464, 1
        %v466 = vadd.f32 %v464, %v465
        %v467 = vsub.f32 %v414, %v420
        %v468 = vsub.f32 %v415, %v421
        %v469 = vand.u32 2147483647, %v467
        %v470 = vand.u32 2147483647, %v468
        %v471 = vadd.f32 %v469, %v470
        %v472 = vrot.slane %v471, 4
        %v473 = vadd.f32 %v471, %v472
        %v474 = vrot.slane %v473, 2
        %v475 = vadd.f32 %v473, %v474
        %v476 = vrot.slane %v475, 1
        %v477 = vadd.f32 %v475, %v476
        %v478 = vlaneseq
        %v479 = vand.u32 %v478, 127
        %vm480 = vcmp.lt.s32.totalorder %v479, 15
        %v481 = vsel %vm480, %v466, 0.0
        %v482 = vsel %vm480, %v477, 0.0
        %vm485 = vcmask 1046528
        %v486 = vrot.slane %v293, 1
        %v487 = vrot.slane %v294, 1
        %v488 = vsel %vm485, %v486, %v487
        %v491 = vsub.f32 %v293, %v488
        %v492 = vsub.f32 %v294, %v487
        %v495 = vrot.slane %v295, 1
        %v496 = vrot.slane %v296, 1
        %v497 = vsel %vm485, %v495, %v496
        %v500 = vsub.f32 %v295, %v497
        %v501 = vsub.f32 %v296, %v496
        %v504 = vrot.slane %v297, 1
        %v505 = vrot.slane %v298, 1
        %v506 = vsel %vm485, %v504, %v505
        %v509 = vsub.f32 %v297, %v506
        %v510 = vsub.f32 %v298, %v505
        %v511 = vand.u32 2147483647, %v509
        %v512 = vand.u32 2147483647, %v510
        %v515 = vrot.slane %v300, 1
        %v516 = vrot.slane %v301, 1
        %v517 = vsel %vm485, %v515, %v516
        %v520 = vsub.f32 %v300, %v517
        %v521 = vsub.f32 %v301, %v516
        %v522 = vand.u32 2147483647, %v520
        %v523 = vand.u32 2147483647, %v521
        %v524 = vadd.f32 %v511, %v522
        %v525 = vadd.f32 %v512, %v523
        %v528 = vrot.slane %v303, 1
        %v529 = vrot.slane %v304, 1
        %v530 = vsel %vm485, %v528, %v529
        %v533 = vsub.f32 %v303, %v530
        %v534 = vsub.f32 %v304, %v529
        %v535 = vand.u32 2147483647, %v533
        %v536 = vand.u32 2147483647, %v534
        %v537 = vadd.f32 %v524, %v535
        %v538 = vadd.f32 %v525, %v536
        %v539 = vmul.f32 %v537, -0.33333334
        %v540 = vmul.f32 %v538, -0.33333334
        %v541 = vmul.f32 %v539, 1.442695
        %v542 = vpow.pop %v541
        %v543 = vmul.f32 %v540, 1.442695
        %v544 = vpow.pop %v543
        %v545 = vand.u32 2147483647, %v491
        %v546 = vand.u32 2147483647, %v492
        %v547 = vmul.f32 %v542, %v545
        %v548 = vmul.f32 %v544, %v546
        %v549 = vsel %vm485, %v548, 0.0
        %v550 = vadd.f32 %v547, %v549
        %v551 = vrot.slane %v550, 4
        %v552 = vadd.f32 %v550, %v551
        %v553 = vrot.slane %v552, 2
        %v554 = vadd.f32 %v552, %v553
        %v555 = vrot.slane %v554, 1
        %v556 = vadd.f32 %v554, %v555
        %v557 = vsub.f32 %v491, %v500
        %v558 = vsub.f32 %v492, %v501
        %v559 = vand.u32 2147483647, %v557
        %v560 = vand.u32 2147483647, %v558
        %v561 = vsel %vm485, %v560, 0.0
        %v562 = vadd.f32 %v559, %v561
        %v563 = vrot.slane %v562, 4
        %v564 = vadd.f32 %v562, %v563
        %v565 = vrot.slane %v564, 2
        %v566 = vadd.f32 %v564, %v565
        %v567 = vrot.slane %v566, 1
        %v568 = vadd.f32 %v566, %v567
        %v569 = vld [vmem:[#allocation2] sm:$0xff]
        %v570 = vsub.f32 %v569, %v293
        %v571 = vrot.slane %v295, 7
        %v573 = vsub.f32 %v569, %v571
        %v574 = vrot.slane %v297, 6
        %v576 = vsub.f32 %v569, %v574
        %v577 = vand.u32 2147483647, %v576
        %v578 = vrot.slane %v300, 5
        %v580 = vsub.f32 %v569, %v578
        %v581 = vand.u32 2147483647, %v580
        %v583 = vrot.slane %v581, 1
        %v585 = vadd.f32 %v577, %v583
        %v586 = vrot.slane %v303, 4
        %v588 = vsub.f32 %v569, %v586
        %v589 = vand.u32 2147483647, %v588
        %v591 = vrot.slane %v589, 2
        %v593 = vadd.f32 %v585, %v591
        %v594 = vmul.f32 %v593, -0.33333334
        %v595 = vmul.f32 %v594, 1.442695
        %v596 = vpow.pop %v595
        %v597 = vand.u32 2147483647, %v570
        %v599 = vrot.slane %v597, 6
        %v601 = vmul.f32 %v596, %v599
        %v602 = vadd.f32 %v556, %v601
        %v604 = vrot.slane %v573, 1
        %v606 = vsub.f32 %v570, %v604
        %v607 = vand.u32 2147483647, %v606
        %v608 = vadd.f32 %v568, %v607
        %v609 = vld [vmem:[%s289] sm:$0xff]
        %v610 = vlaneseq
        %v611 = vshrl.u32 %v610, 7
        %vm612 = vcmp.eq.s32.totalorder %v611, 0
        %v613 = vsel %vm612, 1, 0
        %vm614 = vcmp.eq.s32.totalorder %v613, 1
        %v615 = vsel %vm614, %v389, 0.0
        %vm616 = vcmp.eq.s32.totalorder %v611, 1
        %v617 = vsel %vm616, 1, 0
        %vm618 = vcmp.eq.s32.totalorder %v617, 1
        %v619 = vsel %vm618, %v398, %v615
        %vm620 = vcmp.eq.s32.totalorder %v611, 2
        %v621 = vsel %vm620, 1, 0
        %vm622 = vcmp.eq.s32.totalorder %v621, 1
        %v623 = vsel %vm622, %v409, %v619
        %vm624 = vcmp.eq.s32.totalorder %v611, 3
        %v625 = vsel %vm624, 1, 0
        %vm626 = vcmp.eq.s32.totalorder %v625, 1
        %v627 = vsel %vm626, %v481, %v623
        %vm628 = vcmp.eq.s32.totalorder %v611, 4
        %v629 = vsel %vm628, 1, 0
        %vm630 = vcmp.eq.s32.totalorder %v629, 1
        %v631 = vlaneseq
        %v632 = vshrl.u32 %v631, 7
        %v633 = vsub.s32 2, %v632
        %v634 = vrot.slane %v602, %v633
        %v635 = vsel %vm630, %v634, %v627
        %vm636 = vcmp.eq.s32.totalorder %v611, 5
        %v637 = vsel %vm636, 1, 0
        %vm638 = vcmp.eq.s32.totalorder %v637, 1
        %v639 = vsel %vm638, %v482, %v635
        %vm640 = vcmp.eq.s32.totalorder %v611, 6
        %v641 = vsel %vm640, 1, 0
        %vm642 = vcmp.eq.s32.totalorder %v641, 1
        %v643 = vlaneseq
        %v644 = vshrl.u32 %v643, 7
        %v645 = vsub.s32 0, %v644
        %v646 = vrot.slane %v608, %v645
        %v647 = vsel %vm642, %v646, %v639
        %v648 = vadd.f32 %v609, %v647
        %649 = vst [vmem:[%s289] sm:$0xff] %v648
        %v650 = vlaneseq
        %v651 = vshrl.u32 %v650, 7
        %v652 = vsub.s32 7, %v651
        %v653 = vrot.slane %v294, %v652
        %v654 = vsel %vm614, %v653, 0.0
        %v655 = vlaneseq
        %v656 = vshrl.u32 %v655, 7
        %v657 = vsub.s32 7, %v656
        %v658 = vrot.slane %v296, %v657
        %v659 = vsel %vm618, %v658, %v654
        %v660 = vlaneseq
        %v661 = vshrl.u32 %v660, 7
        %v662 = vsub.s32 7, %v661
        %v663 = vrot.slane %v298, %v662
        %v664 = vsel %vm622, %v663, %v659
        %v665 = vlaneseq
        %v666 = vshrl.u32 %v665, 7
        %v667 = vsub.s32 7, %v666
        %v668 = vrot.slane %v301, %v667
        %v669 = vsel %vm626, %v668, %v664
        %v670 = vlaneseq
        %v671 = vshrl.u32 %v670, 7
        %v672 = vsub.s32 7, %v671
        %v673 = vrot.slane %v304, %v672
        %v674 = vsel %vm630, %v673, %v669
        %675 = vst [vmem:[#allocation2] sm:$0xff] %v674
        %s676 = sand.u32 %s127, 1
        %s677 = scalar_lea.sflag [#allocation5], %s676
        %s678 = sand.u32 %s127, 1
        %s679 = smul.addr %s678, 8
        %s680 = scalar_lea.vmem [#allocation9], %s679
        // Predicated region
        $region49: #{tpu_custom_call.1} parent=31 // pred_check
          %p681 = pneg %p137
        $region50: #{tpu_custom_call.1} parent=31 // pred_check_branch
          %683 = sbr.rel (%p681) target = $region52
        $region51: #{tpu_custom_call.1} parent=31 // pred_region
          %s685 = ssub.s32 128, 128
          %686 = vsyncadd %s677, %s685
          %s687 = smul.addr %s27, 128
          %s688 = scalar_lea.hbm %s3, %s687
          %s690 = sshll.u32 %s680, 4
          %s691 = int_to_ptr.vmem [resolvable:$true] %s690
          %693 = dma.vmem_to_hbm [thread:$0]  %s691, 128, %s688, %s677
        $region52: #{tpu_custom_call.1} parent=31 // pred_fallthru
          _
      $region32: #{tpu_custom_call.1} parent=5 // pred_fallthru
        _
      %p694 = scmp.le.s32.totalorder 2, %s18
      // Predicated region
      $region53: #{tpu_custom_call.1} parent=5 // pred_check
        %p695 = pneg %p694
      $region54: #{tpu_custom_call.1} parent=5 // pred_check_branch
        %697 = sbr.rel (%p695) target = $region56
      $region55: #{tpu_custom_call.1} parent=5 // pred_region
        %s698 = ssub.s32 %s18, 2
        // Predicated region
        $region57: #{tpu_custom_call.1} parent=55 // pred_check
          %p699 = pneg %p143
        $region58: #{tpu_custom_call.1} parent=55 // pred_check_branch
          %701 = sbr.rel (%p699) target = $region60
        $region59: #{tpu_custom_call.1} parent=55 // pred_region
          %s702 = sand.u32 %s128, 1
          %s703 = scalar_lea.sflag [#allocation5], %s702
          %s704 = sand.u32 %s128, 1
          %s705 = smul.addr %s704, 8
          %s706 = scalar_lea.vmem [#allocation9], %s705
          %707 = dma.done %s703, 128
        $region60: #{tpu_custom_call.1} parent=55 // pred_fallthru
          _
      $region56: #{tpu_custom_call.1} parent=5 // pred_fallthru
        _
    $region6: #{tpu_custom_call.1} parent=1 // loop_footer
      %s22 = sadd.s32 1, %s18
    $region7: #{tpu_custom_call.1} parent=1 // loop_footer_branch
      %17 = sbr.rel target = $region3
    $region8: #{tpu_custom_call.1} parent=1 // loop_exit
      _
    %708 = vsyncpa [#allocation4], 1
    %s709 = scalar_lea.sflag [#allocation4], 1
    %710 = vsyncpa %s709, 1
    %711 = vsyncpa [#allocation7], 1
    %s712 = scalar_lea.sflag [#allocation7], 1
    %713 = vsyncpa %s712, 1
    %714 = vsyncpa [#allocation5], 1
    %s715 = scalar_lea.sflag [#allocation5], 1
    %716 = vsyncpa %s715, 1

</llo_original>
